<compile_context>
chip_gen: v7x
topology: tpu7x:2x2x1
jax: 0.10.0
libtpu: 0.0.40
codegen_flags: <defaults>
</compile_context>

<pallas_src>
import functools

import jax
import jax.numpy as jnp
from jax.experimental import pallas as pl
from jax.experimental.pallas import tpu as pltpu


def _round_up(n: int, m: int) -> int:
    return ((n + m - 1) // m) * m


def _device_kind() -> str:
    try:
        return jax.devices()[0].device_kind.lower()
    except Exception:
        return ""


def _budgets():
    """(scoped vmem_limit_bytes, X double-buffer budget bytes, default tk_target)."""
    kind = _device_kind()
    if ("v5" in kind) or ("v6" in kind):
        # 128 MiB physical VMEM: larger scoped limit and bigger X tiles.
        return 64 * 1024 * 1024, 20 * 1024 * 1024, 2048
    # v7x (64 MiB physical VMEM) or unknown: conservative.
    return 32 * 1024 * 1024, 8 * 1024 * 1024, 1024


def design_wrapper_kernel(x_ref, w_ref, b_ref, o_ref, acc_ref, *,
                          tk, kt_per_split, w_slice):
    """Fused multi-model linear heads with K-reduction accumulator.

    x_ref:   (TB, TK)       tile of the flattened input, VMEM
    w_ref:   (Dp, Mp) or (TK, Mp)  stacked per-model weights (resident / streamed)
    b_ref:   (1, Mp)        stacked per-model biases, VMEM resident
    o_ref:   (1, TB, Mp)    out[s, :, m]  (partial when split-K is active)
    acc_ref: (TB, Mp) f32   VMEM scratch accumulator
    """
    s = pl.program_id(0)    # split-K index (extent 1 unless v7x small-batch path)
    k = pl.program_id(2)    # reduction step within this split

    @pl.when(k == 0)
    def _():
        acc_ref[...] = jnp.zeros_like(acc_ref)

    if w_slice:
        # W is fully VMEM-resident; slice the K-chunk for this step.
        koff = pl.multiple_of((s * kt_per_split + k) * tk, 128)
        w_tile = w_ref[pl.ds(koff, tk), :]
    else:
        w_tile = w_ref[...]

    acc_ref[...] += jnp.dot(x_ref[...], w_tile,
                            preferred_element_type=jnp.float32)

    @pl.when(k == pl.num_programs(2) - 1)
    def _():
        # Bias only on split 0 so summing split partials in the wrapper is exact.
        bias = jnp.where(s == 0, b_ref[...], jnp.zeros_like(b_ref[...]))
        o_ref[...] = (acc_ref[...] + bias)[None, :, :].astype(o_ref.dtype)


def stack_model_params(weights, biases):
    """Hoisted (do once, not per forward call) stacking of per-model params."""
    w_stack = jnp.concatenate(weights, axis=-1)            # (D, M)
    b_stack = jnp.concatenate(biases, axis=0)[None, :]     # (1, M)
    return w_stack, b_stack


def design_wrapper_forward(x_nchw, w_stack, b_stack, *, tb_target=1024, tk_target=None):
    """DesignWrapper forward: (B, C, H, W) -> (B, M) == cat of per-model preds."""
    B = x_nchw.shape[0]
    D = 1
    for d in x_nchw.shape[1:]:
        D *= d
    M = w_stack.shape[1]

    x_flat = x_nchw.reshape(B, D)     # row-major flatten == torch.nn.Flatten

    vmem_limit, x_pipe_budget, tk_default = _budgets()
    if tk_target is None:
        tk_target = tk_default

    # Tiny lane padding for M (NOT 128): output is only (B, M).
    Mp = max(8, _round_up(M, 8))

    # ---- TK: prefer a 128-multiple that divides D (no X padding along D). ----
    pad_d = False
    tk = None
    t = (max(128, min(tk_target, D)) // 128) * 128
    while t >= 128:
        if D % t == 0:
            tk = t
            break
        t -= 128
    if tk is None:
        if 2 * 8 * D * 4 <= x_pipe_budget:
            tk = D                                   # single full-D step, no pad
        else:
            # Fallback: pad D (zero rows of W x zero cols of X contribute 0).
            tk = min(max(128, (tk_target // 128) * 128), _round_up(D, 128))
            pad_d = True
    Dp = _round_up(D, tk) if pad_d else D
    kt_total = Dp // tk

    # ---- TB: single batch tile when possible (no row padding at all). ----
    tb_cap = max(8, x_pipe_budget // (2 * tk * 4))
    if B <= tb_cap:
        TB = B
    else:
        TB = max(8, min((tb_cap // 8) * 8, max(8, (tb_target // 8) * 8)))
    Bp = _round_up(B, TB)
    bt = Bp // TB

    # ---- Split-K across the two TensorCores (v7x) for the small-batch case. ----
    kind = _device_kind()
    splits = 2 if ("v7" in kind and bt == 1 and kt_total >= 2
                   and kt_total % 2 == 0) else 1
    kt = kt_total // splits

    # ---- Resident W when small (DMA'd once instead of per batch tile). ----
    w_resident = (Dp * Mp * 4) <= (4 * 1024 * 1024)
    w_slice = w_resident and kt_total > 1

    # ---- Operand prep (X only copied when strictly needed). ----
    x_p = x_flat
    if Bp != B or Dp != D:
        x_p = jnp.pad(x_flat, ((0, Bp - B), (0, Dp - D)))
    w_p = jnp.pad(w_stack, ((0, Dp - D), (0, Mp - M)))
    b_p = jnp.pad(b_stack, ((0, 0), (0, Mp - M)))

    if w_resident:
        w_spec = pl.BlockSpec((Dp, Mp), lambda s, i, k: (0, 0))
    else:
        w_spec = pl.BlockSpec((tk, Mp), lambda s, i, k: (s * kt + k, 0))

    w_hbm_bytes = Dp * Mp * 4 * (1 if w_resident else bt)
    cost = pl.CostEstimate(
        flops=2 * Bp * Dp * Mp,
        transcendentals=0,
        bytes_accessed=4 * Bp * Dp + w_hbm_bytes + 4 * (splits * Bp * Mp + Mp),
    )

    kernel = functools.partial(design_wrapper_kernel,
                               tk=tk, kt_per_split=kt, w_slice=w_slice)

    out_p = pl.pallas_call(
        kernel,
        out_shape=jax.ShapeDtypeStruct((splits, Bp, Mp), jnp.float32),
        grid_spec=pltpu.PrefetchScalarGridSpec(
            num_scalar_prefetch=0,
            grid=(splits, bt, kt),
            in_specs=[
                pl.BlockSpec((TB, tk), lambda s, i, k: (i, s * kt + k)),  # X stream
                w_spec,                                                   # W (resident/stream)
                pl.BlockSpec((1, Mp), lambda s, i, k: (0, 0)),            # bias, resident
            ],
            out_specs=pl.BlockSpec((1, TB, Mp), lambda s, i, k: (s, i, 0)),
            scratch_shapes=[pltpu.VMEM((TB, Mp), jnp.float32)],
        ),
        compiler_params=pltpu.CompilerParams(
            dimension_semantics=("parallel", "parallel", "arbitrary"),
            vmem_limit_bytes=vmem_limit,
        ),
        cost_estimate=cost,
    )(x_p, w_p, b_p)

    out = out_p[0] if splits == 1 else out_p.sum(axis=0)
    return out[:B, :M]


if __name__ == "__main__":
    key = jax.random.PRNGKey(0)

    # Small shapes consistent with an NCHW conv-style input.
    B, C, H, W = 2, 4, 16, 16
    D = C * H * W
    NUM_MODELS = 3

    k_x, *k_params = jax.random.split(key, 1 + 2 * NUM_MODELS)
    x = jax.random.normal(k_x, (B, C, H, W), dtype=jnp.float32)

    weights = []
    biases = []
    for m in range(NUM_MODELS):
        kw = k_params[2 * m]
        kb = k_params[2 * m + 1]
        weights.append(jax.random.normal(kw, (D, 1), dtype=jnp.float32) * 0.02)
        biases.append(jax.random.normal(kb, (1,), dtype=jnp.float32) * 0.1)

    # Stack the per-model params once (hoisted out of the per-call path).
    w_stack, b_stack = stack_model_params(weights, biases)

    out = design_wrapper_forward(x, w_stack, b_stack)
    out = jax.block_until_ready(out)

    # Reference: literal "cat of per-model (B, 1) predictions" semantics.
    x_flat = x.reshape(B, D)
    ref = jnp.concatenate(
        [x_flat @ weights[m] + biases[m] for m in range(NUM_MODELS)], axis=-1
    )
    assert out.shape == (B, NUM_MODELS)
    assert jnp.allclose(out, ref, atol=1e-4, rtol=1e-4)

    print("KERNEL_OK")
</pallas_src>

<mosaic_0001>
module attributes {stable_mosaic.version = 11 : i64} {
  func.func @design_wrapper_kernel(%arg0: i32, %arg1: i32, %arg2: i32, %arg3: memref<2x1024xf32, #tpu.memory_space<vmem>>, %arg4: memref<1024x8xf32, #tpu.memory_space<vmem>>, %arg5: memref<1x8xf32, #tpu.memory_space<vmem>>, %arg6: memref<1x2x8xf32, #tpu.memory_space<vmem>>, %arg7: memref<2x8xf32, #tpu.memory_space<vmem>>) attributes {dimension_semantics = [#tpu.dimension_semantics<parallel>, #tpu.dimension_semantics<parallel>, #tpu.dimension_semantics<arbitrary>], iteration_bounds = array<i64: 1, 1, 1>, scalar_prefetch = 0 : i64, scratch_operands = 1 : i64, tpu.core_type = #tpu.core_type<tc>, window_params = [{transform_indices = @transform_0, window_bounds = array<i64: 2, 1024>}, {pipeline_mode = #tpu.pipeline_mode<synchronous>, transform_indices = @transform_1, window_bounds = array<i64: 1024, 8>}, {pipeline_mode = #tpu.pipeline_mode<synchronous>, transform_indices = @transform_2, window_bounds = array<i64: 1, 8>}, {transform_indices = @transform_3, window_bounds = array<i64: 1, 2, 8>}]} {
    %c0_i32 = arith.constant 0 : i32
    %0 = arith.cmpi eq, %arg2, %c0_i32 : i32
    %1 = arith.extui %0 : i1 to i32
    %c0_i32_0 = arith.constant 0 : i32
    %2 = arith.cmpi ne, %1, %c0_i32_0 : i32
    scf.if %2 {
      %cst_10 = arith.constant 0.000000e+00 : f32
      %12 = vector.broadcast %cst_10 : f32 to vector<2x8xf32>
      %c0_11 = arith.constant 0 : index
      %c0_12 = arith.constant 0 : index
      %13 = vector.load %arg7[%c0_11, %c0_12] : memref<2x8xf32, #tpu.memory_space<vmem>>, vector<2x8xf32>
      tpu.vector_store %arg7[%c0_11, %c0_12], %12 {strides = array<i32>} : memref<2x8xf32, #tpu.memory_space<vmem>>, vector<2x8xf32>,
    } else {
    }
    %c0 = arith.constant 0 : index
    %c0_1 = arith.constant 0 : index
    %3 = vector.load %arg4[%c0, %c0_1] : memref<1024x8xf32, #tpu.memory_space<vmem>>, vector<1024x8xf32>
    %c0_2 = arith.constant 0 : index
    %c0_3 = arith.constant 0 : index
    %4 = vector.load %arg7[%c0_2, %c0_3] : memref<2x8xf32, #tpu.memory_space<vmem>>, vector<2x8xf32>
    %c0_4 = arith.constant 0 : index
    %c0_5 = arith.constant 0 : index
    %5 = vector.load %arg3[%c0_4, %c0_5] : memref<2x1024xf32, #tpu.memory_space<vmem>>, vector<2x1024xf32>
    %cst = arith.constant dense<0.000000e+00> : vector<2x8xf32>
    %6 = tpu.matmul %5, %3, %cst {dimension_numbers = #tpu.dot_dimension_numbers<[1], [0], [0], [1], [0, 0, 1, 1], [], []>} : vector<2x1024xf32>, vector<1024x8xf32>, vector<2x8xf32> -> vector<2x8xf32>
    %7 = arith.addf %4, %6 : vector<2x8xf32>
    %c0_6 = arith.constant 0 : index
    %c0_7 = arith.constant 0 : index
    %8 = vector.load %arg7[%c0_6, %c0_7] : memref<2x8xf32, #tpu.memory_space<vmem>>, vector<2x8xf32>
    tpu.vector_store %arg7[%c0_6, %c0_7], %7 {strides = array<i32>} : memref<2x8xf32, #tpu.memory_space<vmem>>, vector<2x8xf32>,
    %c0_i32_8 = arith.constant 0 : i32
    %9 = arith.cmpi eq, %arg2, %c0_i32_8 : i32
    %10 = arith.extui %9 : i1 to i32
    %c0_i32_9 = arith.constant 0 : i32
    %11 = arith.cmpi ne, %10, %c0_i32_9 : i32
    scf.if %11 {
      %c0_i32_10 = arith.constant 0 : i32
      %12 = arith.cmpi eq, %arg0, %c0_i32_10 : i32
      %c0_11 = arith.constant 0 : index
      %c0_12 = arith.constant 0 : index
      %13 = vector.load %arg5[%c0_11, %c0_12] : memref<1x8xf32, #tpu.memory_space<vmem>>, vector<1x8xf32>
      %cst_13 = arith.constant 0.000000e+00 : f32
      %14 = vector.broadcast %cst_13 : f32 to vector<1x8xf32>
      %15 = arith.select %12, %13, %14 : vector<1x8xf32>
      %c0_14 = arith.constant 0 : index
      %c0_15 = arith.constant 0 : index
      %16 = vector.load %arg7[%c0_14, %c0_15] : memref<2x8xf32, #tpu.memory_space<vmem>>, vector<2x8xf32>
      %17 = vector.broadcast %15 : vector<1x8xf32> to vector<2x8xf32>
      %18 = arith.addf %16, %17 : vector<2x8xf32>
      %19 = vector.shape_cast %18 : vector<2x8xf32> to vector<1x2x8xf32>
      %c0_16 = arith.constant 0 : index
      %c0_17 = arith.constant 0 : index
      %c0_18 = arith.constant 0 : index
      %20 = vector.load %arg6[%c0_16, %c0_17, %c0_18] : memref<1x2x8xf32, #tpu.memory_space<vmem>>, vector<1x2x8xf32>
      tpu.vector_store %arg6[%c0_16, %c0_17, %c0_18], %19 {strides = array<i32>} : memref<1x2x8xf32, #tpu.memory_space<vmem>>, vector<1x2x8xf32>,
    } else {
    }
    return
  }
  func.func @transform_0(%arg0: i32, %arg1: i32, %arg2: i32) -> (i32, i32) {
    %c1_i32 = arith.constant 1 : i32
    %0 = arith.muli %arg0, %c1_i32 : i32
    %1 = arith.addi %0, %arg2 : i32
    %c0_i32 = arith.constant 0 : i32
    return %arg1, %1 : i32, i32
  }
  func.func @transform_1(%arg0: i32, %arg1: i32, %arg2: i32) -> (i32, i32) {
    %c0_i32 = arith.constant 0 : i32
    %c0_i32_0 = arith.constant 0 : i32
    %c0_i32_1 = arith.constant 0 : i32
    return %c0_i32, %c0_i32_0 : i32, i32
  }
  func.func @transform_2(%arg0: i32, %arg1: i32, %arg2: i32) -> (i32, i32) {
    %c0_i32 = arith.constant 0 : i32
    %c0_i32_0 = arith.constant 0 : i32
    %c0_i32_1 = arith.constant 0 : i32
    return %c0_i32, %c0_i32_0 : i32, i32
  }
  func.func @transform_3(%arg0: i32, %arg1: i32, %arg2: i32) -> (i32, i32, i32) {
    %c0_i32 = arith.constant 0 : i32
    %c0_i32_0 = arith.constant 0 : i32
    return %arg0, %arg1, %c0_i32 : i32, i32, i32
  }
}

</mosaic_0001>

<llo_original>
// kernel: tpu_custom_call.1
$region0: #{tpu_custom_call.1}
  #allocation0 [shape = 'u32[]', space=smem, size = 0x4, offset = 0x4, fixed_abs, tag = 'smem constant byte address 0x4 - core index']
  #allocation1 [shape = 'u32[144,128]{1,0:T(1,128)}', space=vmem, size = 0x12000, scoped, tag = 'internal scratch']
  #allocation2 [shape = 'f32[2,8]{1,0:T(2,128)}', space=vmem, size = 0x400, scoped, tag = 'scratch operand']
  %s0 = inlined_call_operand.vmem [shape: f32[2,1024], index: 0, kind: input, shape index: {}]
  %s1 = inlined_call_operand.vmem [shape: f32[1024,8], index: 1, kind: input, shape index: {}]
  %s2 = inlined_call_operand.vmem [shape: f32[1,8], index: 2, kind: input, shape index: {}]
  %s3 = inlined_call_operand.hbm [shape: f32[1,2,8], index: 3, kind: output, shape index: {}]
  %s4 = sld [smem:[#allocation0]]
  $region30: #{tpu_custom_call.1} parent=0
    _
  %s6 = ssub.s32 1, %s4
  %s7 = scalar_select 0, %s6, %s4
  $region1: #{tpu_custom_call.1} parent=0
    #allocation3 [shape = 'u8[1024]{0}', space=vmem, size = 0x400, scoped, tag = 'output window, operand 0, single buffered']
    #allocation4 [shape = 's32[1]{0}', space=sflag, size = 0x4, scoped, tag = 'scoped memory for tpu_custom_call.1']
    %8 = vsyncpa [#allocation4], 0
    // Predicated region
    $region2: #{tpu_custom_call.1} parent=1 // pred_check
      _
    $region3: #{tpu_custom_call.1} parent=1 // pred_check_branch
      %10 = sbr.rel (0) target = $region5
    $region4: #{tpu_custom_call.1} parent=1 // pred_region
      %s11 = sadd.s32 0, 0
      %s12 = smul.u32 8, %s11
      %p13 = scmp.lt.s32.totalorder %s12, 7
      %s14 = scalar_select %p13, %s12, 7
      %s15 = smul.addr %s14, 2
      %s16 = scalar_lea.vmem %s0, %s15
      %s17 = sadd.s32 0, 0
      %s18 = smul.u32 8, %s17
    $region5: #{tpu_custom_call.1} parent=1 // pred_fallthru
      _
    // Predicated region
    $region6: #{tpu_custom_call.1} parent=1 // pred_check
      _
    $region7: #{tpu_custom_call.1} parent=1 // pred_check_branch
      %20 = sbr.rel (0) target = $region9
    $region8: #{tpu_custom_call.1} parent=1 // pred_region
      _
    $region9: #{tpu_custom_call.1} parent=1 // pred_fallthru
      _
    // Predicated region
    $region10: #{tpu_custom_call.1} parent=1 // pred_check
      _
    $region11: #{tpu_custom_call.1} parent=1 // pred_check_branch
      %22 = sbr.rel (0) target = $region13
    $region12: #{tpu_custom_call.1} parent=1 // pred_region
      _
    $region13: #{tpu_custom_call.1} parent=1 // pred_fallthru
      _
    %s23 = sadd.s32 0, 0
    %s24 = smul.u32 8, %s23
    %p25 = scmp.lt.s32.totalorder %s24, 7
    %s26 = scalar_select %p25, %s24, 7
    %s27 = smul.addr %s26, 2
    %s28 = scalar_lea.vmem %s0, %s27
    %s29 = sadd.s32 0, 0
    %s30 = smul.u32 8, %s29
    %p31 = scmp.lt.s32.totalorder %s30, 7
    %s32 = scalar_select %p31, %s30, 7
    %s33 = smul.addr %s32, 2
    %s34 = scalar_lea.vmem %s0, %s33
    %s35 = sadd.s32 0, 0
    %s36 = smul.u32 8, %s35
    %p37 = scmp.eq.s32.totalorder 0, 0
    // Predicated region
    $region14: #{tpu_custom_call.1} parent=1 // pred_check
      %p38 = pneg %p37
    $region15: #{tpu_custom_call.1} parent=1 // pred_check_branch
      %40 = sbr.rel (%p38) target = $region17
    $region16: #{tpu_custom_call.1} parent=1 // pred_region
      %vm41 = vcmask 58368
      %42 = vst.msk [vmem:[#allocation2] sm:$0x3] %vm41, 0.0
    $region17: #{tpu_custom_call.1} parent=1 // pred_fallthru
      _
    %v43 = vld [vmem:[%s1] sm:$0xff]
    %v44 = vld [vmem:[%s1 + $0x8] sm:$0xff]
    %v45 = vld [vmem:[%s1 + $0x10] sm:$0xff]
    %v46 = vld [vmem:[%s1 + $0x18] sm:$0xff]
    %v47 = vld [vmem:[%s1 + $0x20] sm:$0xff]
    %v48 = vld [vmem:[%s1 + $0x28] sm:$0xff]
    %v49 = vld [vmem:[%s1 + $0x30] sm:$0xff]
    %v50 = vld [vmem:[%s1 + $0x38] sm:$0xff]
    %v51 = vld [vmem:[%s1 + $0x40] sm:$0xff]
    %v52 = vld [vmem:[%s1 + $0x48] sm:$0xff]
    %v53 = vld [vmem:[%s1 + $0x50] sm:$0xff]
    %v54 = vld [vmem:[%s1 + $0x58] sm:$0xff]
    %v55 = vld [vmem:[%s1 + $0x60] sm:$0xff]
    %v56 = vld [vmem:[%s1 + $0x68] sm:$0xff]
    %v57 = vld [vmem:[%s1 + $0x70] sm:$0xff]
    %v58 = vld [vmem:[%s1 + $0x78] sm:$0xff]
    %v59 = vld [vmem:[%s1 + $0x80] sm:$0xff]
    %v60 = vld [vmem:[%s1 + $0x88] sm:$0xff]
    %v61 = vld [vmem:[%s1 + $0x90] sm:$0xff]
    %v62 = vld [vmem:[%s1 + $0x98] sm:$0xff]
    %v63 = vld [vmem:[%s1 + $0xa0] sm:$0xff]
    %v64 = vld [vmem:[%s1 + $0xa8] sm:$0xff]
    %v65 = vld [vmem:[%s1 + $0xb0] sm:$0xff]
    %v66 = vld [vmem:[%s1 + $0xb8] sm:$0xff]
    %v67 = vld [vmem:[%s1 + $0xc0] sm:$0xff]
    %v68 = vld [vmem:[%s1 + $0xc8] sm:$0xff]
    %v69 = vld [vmem:[%s1 + $0xd0] sm:$0xff]
    %v70 = vld [vmem:[%s1 + $0xd8] sm:$0xff]
    %v71 = vld [vmem:[%s1 + $0xe0] sm:$0xff]
    %v72 = vld [vmem:[%s1 + $0xe8] sm:$0xff]
    %v73 = vld [vmem:[%s1 + $0xf0] sm:$0xff]
    %v74 = vld [vmem:[%s1 + $0xf8] sm:$0xff]
    %v75 = vld [vmem:[%s1 + $0x100] sm:$0xff]
    %v76 = vld [vmem:[%s1 + $0x108] sm:$0xff]
    %v77 = vld [vmem:[%s1 + $0x110] sm:$0xff]
    %v78 = vld [vmem:[%s1 + $0x118] sm:$0xff]
    %v79 = vld [vmem:[%s1 + $0x120] sm:$0xff]
    %v80 = vld [vmem:[%s1 + $0x128] sm:$0xff]
    %v81 = vld [vmem:[%s1 + $0x130] sm:$0xff]
    %v82 = vld [vmem:[%s1 + $0x138] sm:$0xff]
    %v83 = vld [vmem:[%s1 + $0x140] sm:$0xff]
    %v84 = vld [vmem:[%s1 + $0x148] sm:$0xff]
    %v85 = vld [vmem:[%s1 + $0x150] sm:$0xff]
    %v86 = vld [vmem:[%s1 + $0x158] sm:$0xff]
    %v87 = vld [vmem:[%s1 + $0x160] sm:$0xff]
    %v88 = vld [vmem:[%s1 + $0x168] sm:$0xff]
    %v89 = vld [vmem:[%s1 + $0x170] sm:$0xff]
    %v90 = vld [vmem:[%s1 + $0x178] sm:$0xff]
    %v91 = vld [vmem:[%s1 + $0x180] sm:$0xff]
    %v92 = vld [vmem:[%s1 + $0x188] sm:$0xff]
    %v93 = vld [vmem:[%s1 + $0x190] sm:$0xff]
    %v94 = vld [vmem:[%s1 + $0x198] sm:$0xff]
    %v95 = vld [vmem:[%s1 + $0x1a0] sm:$0xff]
    %v96 = vld [vmem:[%s1 + $0x1a8] sm:$0xff]
    %v97 = vld [vmem:[%s1 + $0x1b0] sm:$0xff]
    %v98 = vld [vmem:[%s1 + $0x1b8] sm:$0xff]
    %v99 = vld [vmem:[%s1 + $0x1c0] sm:$0xff]
    %v100 = vld [vmem:[%s1 + $0x1c8] sm:$0xff]
    %v101 = vld [vmem:[%s1 + $0x1d0] sm:$0xff]
    %v102 = vld [vmem:[%s1 + $0x1d8] sm:$0xff]
    %v103 = vld [vmem:[%s1 + $0x1e0] sm:$0xff]
    %v104 = vld [vmem:[%s1 + $0x1e8] sm:$0xff]
    %v105 = vld [vmem:[%s1 + $0x1f0] sm:$0xff]
    %v106 = vld [vmem:[%s1 + $0x1f8] sm:$0xff]
    %v107 = vld [vmem:[%s1 + $0x200] sm:$0xff]
    %v108 = vld [vmem:[%s1 + $0x208] sm:$0xff]
    %v109 = vld [vmem:[%s1 + $0x210] sm:$0xff]
    %v110 = vld [vmem:[%s1 + $0x218] sm:$0xff]
    %v111 = vld [vmem:[%s1 + $0x220] sm:$0xff]
    %v112 = vld [vmem:[%s1 + $0x228] sm:$0xff]
    %v113 = vld [vmem:[%s1 + $0x230] sm:$0xff]
    %v114 = vld [vmem:[%s1 + $0x238] sm:$0xff]
    %v115 = vld [vmem:[%s1 + $0x240] sm:$0xff]
    %v116 = vld [vmem:[%s1 + $0x248] sm:$0xff]
    %v117 = vld [vmem:[%s1 + $0x250] sm:$0xff]
    %v118 = vld [vmem:[%s1 + $0x258] sm:$0xff]
    %v119 = vld [vmem:[%s1 + $0x260] sm:$0xff]
    %v120 = vld [vmem:[%s1 + $0x268] sm:$0xff]
    %v121 = vld [vmem:[%s1 + $0x270] sm:$0xff]
    %v122 = vld [vmem:[%s1 + $0x278] sm:$0xff]
    %v123 = vld [vmem:[%s1 + $0x280] sm:$0xff]
    %v124 = vld [vmem:[%s1 + $0x288] sm:$0xff]
    %v125 = vld [vmem:[%s1 + $0x290] sm:$0xff]
    %v126 = vld [vmem:[%s1 + $0x298] sm:$0xff]
    %v127 = vld [vmem:[%s1 + $0x2a0] sm:$0xff]
    %v128 = vld [vmem:[%s1 + $0x2a8] sm:$0xff]
    %v129 = vld [vmem:[%s1 + $0x2b0] sm:$0xff]
    %v130 = vld [vmem:[%s1 + $0x2b8] sm:$0xff]
    %v131 = vld [vmem:[%s1 + $0x2c0] sm:$0xff]
    %v132 = vld [vmem:[%s1 + $0x2c8] sm:$0xff]
    %v133 = vld [vmem:[%s1 + $0x2d0] sm:$0xff]
    %v134 = vld [vmem:[%s1 + $0x2d8] sm:$0xff]
    %v135 = vld [vmem:[%s1 + $0x2e0] sm:$0xff]
    %v136 = vld [vmem:[%s1 + $0x2e8] sm:$0xff]
    %v137 = vld [vmem:[%s1 + $0x2f0] sm:$0xff]
    %v138 = vld [vmem:[%s1 + $0x2f8] sm:$0xff]
    %v139 = vld [vmem:[%s1 + $0x300] sm:$0xff]
    %v140 = vld [vmem:[%s1 + $0x308] sm:$0xff]
    %v141 = vld [vmem:[%s1 + $0x310] sm:$0xff]
    %v142 = vld [vmem:[%s1 + $0x318] sm:$0xff]
    %v143 = vld [vmem:[%s1 + $0x320] sm:$0xff]
    %v144 = vld [vmem:[%s1 + $0x328] sm:$0xff]
    %v145 = vld [vmem:[%s1 + $0x330] sm:$0xff]
    %v146 = vld [vmem:[%s1 + $0x338] sm:$0xff]
    %v147 = vld [vmem:[%s1 + $0x340] sm:$0xff]
    %v148 = vld [vmem:[%s1 + $0x348] sm:$0xff]
    %v149 = vld [vmem:[%s1 + $0x350] sm:$0xff]
    %v150 = vld [vmem:[%s1 + $0x358] sm:$0xff]
    %v151 = vld [vmem:[%s1 + $0x360] sm:$0xff]
    %v152 = vld [vmem:[%s1 + $0x368] sm:$0xff]
    %v153 = vld [vmem:[%s1 + $0x370] sm:$0xff]
    %v154 = vld [vmem:[%s1 + $0x378] sm:$0xff]
    %v155 = vld [vmem:[%s1 + $0x380] sm:$0xff]
    %v156 = vld [vmem:[%s1 + $0x388] sm:$0xff]
    %v157 = vld [vmem:[%s1 + $0x390] sm:$0xff]
    %v158 = vld [vmem:[%s1 + $0x398] sm:$0xff]
    %v159 = vld [vmem:[%s1 + $0x3a0] sm:$0xff]
    %v160 = vld [vmem:[%s1 + $0x3a8] sm:$0xff]
    %v161 = vld [vmem:[%s1 + $0x3b0] sm:$0xff]
    %v162 = vld [vmem:[%s1 + $0x3b8] sm:$0xff]
    %v163 = vld [vmem:[%s1 + $0x3c0] sm:$0xff]
    %v164 = vld [vmem:[%s1 + $0x3c8] sm:$0xff]
    %v165 = vld [vmem:[%s1 + $0x3d0] sm:$0xff]
    %v166 = vld [vmem:[%s1 + $0x3d8] sm:$0xff]
    %v167 = vld [vmem:[%s1 + $0x3e0] sm:$0xff]
    %v168 = vld [vmem:[%s1 + $0x3e8] sm:$0xff]
    %v169 = vld [vmem:[%s1 + $0x3f0] sm:$0xff]
    %v170 = vld [vmem:[%s1 + $0x3f8] sm:$0xff]
    %v171 = vld [vmem:[#allocation2] sm:$0x3]
    %v172 = vld [vmem:[%s34] sm:$0xff]
    %v173 = vld [vmem:[%s34 + $0x8] sm:$0xff]
    %v176 = vcombine.high %v172, %v172
    %v178 = vunpack.c.l.s4 1983009808
    %v179 = vunpack.c.0.s8 %v178
    %v180 = vlaneseq
    %v181 = vshrl.u32 %v180, 7
    %v182 = vsub.s32 %v179, %v181
    %v183 = vrot.slane %v172, %v182
    %v185 = vunpack.c.l.s4 1983009808
    %v186 = vunpack.c.0.s8 %v185
    %v187 = vlaneseq
    %v188 = vshrl.u32 %v187, 7
    %v189 = vsub.s32 %v186, %v188
    %v190 = vrot.slane %v176, %v189
    %v191 = vcombine.high %v183, %v183
    %v192 = vcombine.high %v190, %v190
    %v193 = vcombine.high %v173, %v173
    %v195 = vunpack.c.l.s4 1983009808
    %v196 = vunpack.c.0.s8 %v195
    %v197 = vlaneseq
    %v198 = vshrl.u32 %v197, 7
    %v199 = vsub.s32 %v196, %v198
    %v200 = vrot.slane %v173, %v199
    %v202 = vunpack.c.l.s4 1983009808
    %v203 = vunpack.c.0.s8 %v202
    %v204 = vlaneseq
    %v205 = vshrl.u32 %v204, 7
    %v206 = vsub.s32 %v203, %v205
    %v207 = vrot.slane %v193, %v206
    %v208 = vcombine.high %v200, %v200
    %v209 = vcombine.high %v207, %v207
    %218 = vmatprep.subr.mxu0 0.0
    %219 = vmatpush1.msra.mxu0 %v43
    %220 = vmatprep.subr.mxu0 0.0
    %221 = vmatpush1.msra.mxu0 %v44
    %222 = vmatprep.subr.mxu0 0.0
    %223 = vmatpush1.msra.mxu0 %v45
    %224 = vmatprep.subr.mxu0 0.0
    %225 = vmatpush1.msra.mxu0 %v46
    %226 = vmatprep.subr.mxu0 0.0
    %227 = vmatpush1.msra.mxu0 %v47
    %228 = vmatprep.subr.mxu0 0.0
    %229 = vmatpush1.msra.mxu0 %v48
    %230 = vmatprep.subr.mxu0 0.0
    %231 = vmatpush1.msra.mxu0 %v49
    %232 = vmatprep.subr.mxu0 0.0
    %233 = vmatpush1.msra.mxu0 %v50
    %234 = vmatprep.subr.mxu0 0.0
    %235 = vmatpush1.msra.mxu0 %v51
    %236 = vmatprep.subr.mxu0 0.0
    %237 = vmatpush1.msra.mxu0 %v52
    %238 = vmatprep.subr.mxu0 0.0
    %239 = vmatpush1.msra.mxu0 %v53
    %240 = vmatprep.subr.mxu0 0.0
    %241 = vmatpush1.msra.mxu0 %v54
    %242 = vmatprep.subr.mxu0 0.0
    %243 = vmatpush1.msra.mxu0 %v55
    %244 = vmatprep.subr.mxu0 0.0
    %245 = vmatpush1.msra.mxu0 %v56
    %246 = vmatprep.subr.mxu0 0.0
    %247 = vmatpush1.msra.mxu0 %v57
    %248 = vmatprep.subr.mxu0 0.0
    %249 = vmatpush1.msra.mxu0 %v58
    %250 = vmatprep.subr.mxu0 0.0
    %251 = vmatpush1.msra.mxu0 %v59
    %252 = vmatprep.subr.mxu0 0.0
    %253 = vmatpush1.msra.mxu0 %v60
    %254 = vmatprep.subr.mxu0 0.0
    %255 = vmatpush1.msra.mxu0 %v61
    %256 = vmatprep.subr.mxu0 0.0
    %257 = vmatpush1.msra.mxu0 %v62
    %258 = vmatprep.subr.mxu0 0.0
    %259 = vmatpush1.msra.mxu0 %v63
    %260 = vmatprep.subr.mxu0 0.0
    %261 = vmatpush1.msra.mxu0 %v64
    %262 = vmatprep.subr.mxu0 0.0
    %263 = vmatpush1.msra.mxu0 %v65
    %264 = vmatprep.subr.mxu0 0.0
    %265 = vmatpush1.msra.mxu0 %v66
    %266 = vmatprep.subr.mxu0 0.0
    %267 = vmatpush1.msra.mxu0 %v67
    %268 = vmatprep.subr.mxu0 0.0
    %269 = vmatpush1.msra.mxu0 %v68
    %270 = vmatprep.subr.mxu0 0.0
    %271 = vmatpush1.msra.mxu0 %v69
    %272 = vmatprep.subr.mxu0 0.0
    %273 = vmatpush1.msra.mxu0 %v70
    %274 = vmatprep.subr.mxu0 0.0
    %275 = vmatpush1.msra.mxu0 %v71
    %276 = vmatprep.subr.mxu0 0.0
    %277 = vmatpush1.msra.mxu0 %v72
    %278 = vmatprep.subr.mxu0 0.0
    %279 = vmatpush1.msra.mxu0 %v73
    %280 = vmatprep.subr.mxu0 0.0
    %281 = vmatpush1.msra.mxu0 %v74
    %282 = vmatprep.mubr.f32.mxu0 %v191
    %283 = vmatmul.mubr.f32.gmra.mrb[0].mxu0 %v183
    %v284 = vpop.f32.mrb[0].mxu0
    %v285 = vadd.f32 0.0, %v284
    %v286 = vpop.f32.mrb[0].mxu0
    %287 = vdwg.mxu0
    %288 = vmatprep.subr.mxu0 0.0
    %289 = vmatpush1.msra.mxu0 %v75
    %290 = vmatprep.subr.mxu0 0.0
    %291 = vmatpush1.msra.mxu0 %v76
    %292 = vmatprep.subr.mxu0 0.0
    %293 = vmatpush1.msra.mxu0 %v77
    %294 = vmatprep.subr.mxu0 0.0
    %295 = vmatpush1.msra.mxu0 %v78
    %296 = vmatprep.subr.mxu0 0.0
    %297 = vmatpush1.msra.mxu0 %v79
    %298 = vmatprep.subr.mxu0 0.0
    %299 = vmatpush1.msra.mxu0 %v80
    %300 = vmatprep.subr.mxu0 0.0
    %301 = vmatpush1.msra.mxu0 %v81
    %302 = vmatprep.subr.mxu0 0.0
    %303 = vmatpush1.msra.mxu0 %v82
    %304 = vmatprep.subr.mxu0 0.0
    %305 = vmatpush1.msra.mxu0 %v83
    %306 = vmatprep.subr.mxu0 0.0
    %307 = vmatpush1.msra.mxu0 %v84
    %308 = vmatprep.subr.mxu0 0.0
    %309 = vmatpush1.msra.mxu0 %v85
    %310 = vmatprep.subr.mxu0 0.0
    %311 = vmatpush1.msra.mxu0 %v86
    %312 = vmatprep.subr.mxu0 0.0
    %313 = vmatpush1.msra.mxu0 %v87
    %314 = vmatprep.subr.mxu0 0.0
    %315 = vmatpush1.msra.mxu0 %v88
    %316 = vmatprep.subr.mxu0 0.0
    %317 = vmatpush1.msra.mxu0 %v89
    %318 = vmatprep.subr.mxu0 0.0
    %319 = vmatpush1.msra.mxu0 %v90
    %320 = vmatprep.subr.mxu0 0.0
    %321 = vmatpush1.msra.mxu0 %v91
    %322 = vmatprep.subr.mxu0 0.0
    %323 = vmatpush1.msra.mxu0 %v92
    %324 = vmatprep.subr.mxu0 0.0
    %325 = vmatpush1.msra.mxu0 %v93
    %326 = vmatprep.subr.mxu0 0.0
    %327 = vmatpush1.msra.mxu0 %v94
    %328 = vmatprep.subr.mxu0 0.0
    %329 = vmatpush1.msra.mxu0 %v95
    %330 = vmatprep.subr.mxu0 0.0
    %331 = vmatpush1.msra.mxu0 %v96
    %332 = vmatprep.subr.mxu0 0.0
    %333 = vmatpush1.msra.mxu0 %v97
    %334 = vmatprep.subr.mxu0 0.0
    %335 = vmatpush1.msra.mxu0 %v98
    %336 = vmatprep.subr.mxu0 0.0
    %337 = vmatpush1.msra.mxu0 %v99
    %338 = vmatprep.subr.mxu0 0.0
    %339 = vmatpush1.msra.mxu0 %v100
    %340 = vmatprep.subr.mxu0 0.0
    %341 = vmatpush1.msra.mxu0 %v101
    %342 = vmatprep.subr.mxu0 0.0
    %343 = vmatpush1.msra.mxu0 %v102
    %344 = vmatprep.subr.mxu0 0.0
    %345 = vmatpush1.msra.mxu0 %v103
    %346 = vmatprep.subr.mxu0 0.0
    %347 = vmatpush1.msra.mxu0 %v104
    %348 = vmatprep.subr.mxu0 0.0
    %349 = vmatpush1.msra.mxu0 %v105
    %350 = vmatprep.subr.mxu0 0.0
    %351 = vmatpush1.msra.mxu0 %v106
    %352 = vmatprep.mubr.f32.mxu0 %v192
    %353 = vmatmul.mubr.f32.gmra.mrb[0].mxu0 %v190
    %v354 = vpop.f32.mrb[0].mxu0
    %v355 = vadd.f32 %v285, %v354
    %v356 = vpop.f32.mrb[0].mxu0
    %357 = vdwg.mxu0
    %358 = vmatprep.subr.mxu0 0.0
    %359 = vmatpush1.msra.mxu0 %v107
    %360 = vmatprep.subr.mxu0 0.0
    %361 = vmatpush1.msra.mxu0 %v108
    %362 = vmatprep.subr.mxu0 0.0
    %363 = vmatpush1.msra.mxu0 %v109
    %364 = vmatprep.subr.mxu0 0.0
    %365 = vmatpush1.msra.mxu0 %v110
    %366 = vmatprep.subr.mxu0 0.0
    %367 = vmatpush1.msra.mxu0 %v111
    %368 = vmatprep.subr.mxu0 0.0
    %369 = vmatpush1.msra.mxu0 %v112
    %370 = vmatprep.subr.mxu0 0.0
    %371 = vmatpush1.msra.mxu0 %v113
    %372 = vmatprep.subr.mxu0 0.0
    %373 = vmatpush1.msra.mxu0 %v114
    %374 = vmatprep.subr.mxu0 0.0
    %375 = vmatpush1.msra.mxu0 %v115
    %376 = vmatprep.subr.mxu0 0.0
    %377 = vmatpush1.msra.mxu0 %v116
    %378 = vmatprep.subr.mxu0 0.0
    %379 = vmatpush1.msra.mxu0 %v117
    %380 = vmatprep.subr.mxu0 0.0
    %381 = vmatpush1.msra.mxu0 %v118
    %382 = vmatprep.subr.mxu0 0.0
    %383 = vmatpush1.msra.mxu0 %v119
    %384 = vmatprep.subr.mxu0 0.0
    %385 = vmatpush1.msra.mxu0 %v120
    %386 = vmatprep.subr.mxu0 0.0
    %387 = vmatpush1.msra.mxu0 %v121
    %388 = vmatprep.subr.mxu0 0.0
    %389 = vmatpush1.msra.mxu0 %v122
    %390 = vmatprep.subr.mxu0 0.0
    %391 = vmatpush1.msra.mxu0 %v123
    %392 = vmatprep.subr.mxu0 0.0
    %393 = vmatpush1.msra.mxu0 %v124
    %394 = vmatprep.subr.mxu0 0.0
    %395 = vmatpush1.msra.mxu0 %v125
    %396 = vmatprep.subr.mxu0 0.0
    %397 = vmatpush1.msra.mxu0 %v126
    %398 = vmatprep.subr.mxu0 0.0
    %399 = vmatpush1.msra.mxu0 %v127
    %400 = vmatprep.subr.mxu0 0.0
    %401 = vmatpush1.msra.mxu0 %v128
    %402 = vmatprep.subr.mxu0 0.0
    %403 = vmatpush1.msra.mxu0 %v129
    %404 = vmatprep.subr.mxu0 0.0
    %405 = vmatpush1.msra.mxu0 %v130
    %406 = vmatprep.subr.mxu0 0.0
    %407 = vmatpush1.msra.mxu0 %v131
    %408 = vmatprep.subr.mxu0 0.0
    %409 = vmatpush1.msra.mxu0 %v132
    %410 = vmatprep.subr.mxu0 0.0
    %411 = vmatpush1.msra.mxu0 %v133
    %412 = vmatprep.subr.mxu0 0.0
    %413 = vmatpush1.msra.mxu0 %v134
    %414 = vmatprep.subr.mxu0 0.0
    %415 = vmatpush1.msra.mxu0 %v135
    %416 = vmatprep.subr.mxu0 0.0
    %417 = vmatpush1.msra.mxu0 %v136
    %418 = vmatprep.subr.mxu0 0.0
    %419 = vmatpush1.msra.mxu0 %v137
    %420 = vmatprep.subr.mxu0 0.0
    %421 = vmatpush1.msra.mxu0 %v138
    %422 = vmatprep.mubr.f32.mxu0 %v208
    %423 = vmatmul.mubr.f32.gmra.mrb[0].mxu0 %v200
    %v424 = vpop.f32.mrb[0].mxu0
    %v425 = vadd.f32 %v355, %v424
    %v426 = vpop.f32.mrb[0].mxu0
    %427 = vdwg.mxu0
    %428 = vmatprep.subr.mxu0 0.0
    %429 = vmatpush1.msra.mxu0 %v139
    %430 = vmatprep.subr.mxu0 0.0
    %431 = vmatpush1.msra.mxu0 %v140
    %432 = vmatprep.subr.mxu0 0.0
    %433 = vmatpush1.msra.mxu0 %v141
    %434 = vmatprep.subr.mxu0 0.0
    %435 = vmatpush1.msra.mxu0 %v142
    %436 = vmatprep.subr.mxu0 0.0
    %437 = vmatpush1.msra.mxu0 %v143
    %438 = vmatprep.subr.mxu0 0.0
    %439 = vmatpush1.msra.mxu0 %v144
    %440 = vmatprep.subr.mxu0 0.0
    %441 = vmatpush1.msra.mxu0 %v145
    %442 = vmatprep.subr.mxu0 0.0
    %443 = vmatpush1.msra.mxu0 %v146
    %444 = vmatprep.subr.mxu0 0.0
    %445 = vmatpush1.msra.mxu0 %v147
    %446 = vmatprep.subr.mxu0 0.0
    %447 = vmatpush1.msra.mxu0 %v148
    %448 = vmatprep.subr.mxu0 0.0
    %449 = vmatpush1.msra.mxu0 %v149
    %450 = vmatprep.subr.mxu0 0.0
    %451 = vmatpush1.msra.mxu0 %v150
    %452 = vmatprep.subr.mxu0 0.0
    %453 = vmatpush1.msra.mxu0 %v151
    %454 = vmatprep.subr.mxu0 0.0
    %455 = vmatpush1.msra.mxu0 %v152
    %456 = vmatprep.subr.mxu0 0.0
    %457 = vmatpush1.msra.mxu0 %v153
    %458 = vmatprep.subr.mxu0 0.0
    %459 = vmatpush1.msra.mxu0 %v154
    %460 = vmatprep.subr.mxu0 0.0
    %461 = vmatpush1.msra.mxu0 %v155
    %462 = vmatprep.subr.mxu0 0.0
    %463 = vmatpush1.msra.mxu0 %v156
    %464 = vmatprep.subr.mxu0 0.0
    %465 = vmatpush1.msra.mxu0 %v157
    %466 = vmatprep.subr.mxu0 0.0
    %467 = vmatpush1.msra.mxu0 %v158
    %468 = vmatprep.subr.mxu0 0.0
    %469 = vmatpush1.msra.mxu0 %v159
    %470 = vmatprep.subr.mxu0 0.0
    %471 = vmatpush1.msra.mxu0 %v160
    %472 = vmatprep.subr.mxu0 0.0
    %473 = vmatpush1.msra.mxu0 %v161
    %474 = vmatprep.subr.mxu0 0.0
    %475 = vmatpush1.msra.mxu0 %v162
    %476 = vmatprep.subr.mxu0 0.0
    %477 = vmatpush1.msra.mxu0 %v163
    %478 = vmatprep.subr.mxu0 0.0
    %479 = vmatpush1.msra.mxu0 %v164
    %480 = vmatprep.subr.mxu0 0.0
    %481 = vmatpush1.msra.mxu0 %v165
    %482 = vmatprep.subr.mxu0 0.0
    %483 = vmatpush1.msra.mxu0 %v166
    %484 = vmatprep.subr.mxu0 0.0
    %485 = vmatpush1.msra.mxu0 %v167
    %486 = vmatprep.subr.mxu0 0.0
    %487 = vmatpush1.msra.mxu0 %v168
    %488 = vmatprep.subr.mxu0 0.0
    %489 = vmatpush1.msra.mxu0 %v169
    %490 = vmatprep.subr.mxu0 0.0
    %491 = vmatpush1.msra.mxu0 %v170
    %492 = vmatprep.mubr.f32.mxu0 %v209
    %493 = vmatmul.mubr.f32.gmra.mrb[0].mxu0 %v207
    %v494 = vpop.f32.mrb[0].mxu0
    %v495 = vadd.f32 %v425, %v494
    %v496 = vpop.f32.mrb[0].mxu0
    %497 = vdwg.mxu0
    %v498 = vadd.f32 %v171, %v495
    %vm499 = vcmask 58368
    %500 = vst.msk [vmem:[#allocation2] sm:$0x3] %vm499, %v498
    // Predicated region
    $region18: #{tpu_custom_call.1} parent=1 // pred_check
      %p501 = pneg %p37
    $region19: #{tpu_custom_call.1} parent=1 // pred_check_branch
      %503 = sbr.rel (%p501) target = $region21
    $region20: #{tpu_custom_call.1} parent=1 // pred_region
      %p504 = scmp.eq.s32.totalorder 0, 0
      %v505 = vld [vmem:[%s2] sm:$0x1]
      %s506 = scalar_select %p504, 1, 0
      %v507 = vstv %s506
      %vm508 = vcmp.eq.s32.totalorder %v507, 1
      %v509 = vsel %vm508, %v505, 0.0
      %v510 = vld [vmem:[#allocation2] sm:$0x3]
      %v512 = vlaneseq
      %v513 = vshrl.u32 %v512, 7
      %v514 = vsub.s32 0, %v513
      %v515 = vrot.slane %v509, %v514
      %v517 = vadd.f32 %v510, %v515
      %518 = vst.msk [vmem:[#allocation3] sm:$0x3] %vm499, %v517
    $region21: #{tpu_custom_call.1} parent=1 // pred_fallthru
      _
    // Predicated region
    $region22: #{tpu_custom_call.1} parent=1 // pred_check
      _
    $region23: #{tpu_custom_call.1} parent=1 // pred_check_branch
      %520 = sbr.rel (0) target = $region25
    $region24: #{tpu_custom_call.1} parent=1 // pred_region
      %s522 = ssub.s32 32, 32
      %523 = vsyncadd [#allocation4], %s522
      %s525 = sshll.u32 [#allocation3], 4
      %s526 = int_to_ptr.vmem [resolvable:$true] %s525
      %528 = dma.vmem_to_hbm [thread:$0]  %s526, 32, %s3, [#allocation4]
    $region25: #{tpu_custom_call.1} parent=1 // pred_fallthru
      _
    // Predicated region
    $region26: #{tpu_custom_call.1} parent=1 // pred_check
      _
    $region27: #{tpu_custom_call.1} parent=1 // pred_check_branch
      %530 = sbr.rel (0) target = $region29
    $region28: #{tpu_custom_call.1} parent=1 // pred_region
      %531 = dma.done [#allocation4], 32
    $region29: #{tpu_custom_call.1} parent=1 // pred_fallthru
      _
    %532 = vsyncpa [#allocation4], 1

</llo_original>
